<compile_context>
chip_gen: v7x
topology: tpu7x:2x2x1
jax: 0.10.0
libtpu: 0.0.40
codegen_flags: <defaults>
</compile_context>

<pallas_src>
import functools

import jax
import jax.numpy as jnp
from jax.experimental import pallas as pl
from jax.experimental.pallas import tpu as pltpu

_LANE = 128      # vreg lane width
_SUBLANE = 8     # vreg sublane count


def _round_up(x, m):
    return ((x + m - 1) // m) * m


def _qnet_kernel(x_ref, w1_ref, b1_ref, w2_ref, b2_ref, o_ref):
    # hidden = relu(x @ W1 + b1)  -- MXU matmul with f32 accumulation
    h = jnp.dot(x_ref[...], w1_ref[...], preferred_element_type=jnp.float32)
    h = jnp.maximum(h + b1_ref[...], 0.0)          # (TB, Hp) + (1, Hp) broadcast
    # out = hidden @ W2 + b2
    y = jnp.dot(h.astype(w2_ref.dtype), w2_ref[...],
                preferred_element_type=jnp.float32)
    o_ref[...] = (y + b2_ref[...]).astype(o_ref.dtype)


@functools.partial(jax.jit, static_argnames=("tile_b",))
def linear_qnet_forward(x, w1, b1, w2, b2, *, tile_b=256):
    """Fused forward of Linear->ReLU->Linear.

    x : (B, In); w1 : (In, H); b1 : (1, H); w2 : (H, O); b2 : (1, O) -> (B, O)
    """
    B, In = x.shape
    H = w1.shape[1]
    O = w2.shape[1]
    dt = x.dtype

    # Pad MXU / lane dims to 128 so both dots run full systolic passes and the
    # output block is lane-dense (unmasked stores).
    In_p = _round_up(In, _LANE)
    H_p = _round_up(H, _LANE)
    O_p = _round_up(O, _LANE)

    # Batch tile: multiple of 8 sublanes, capped at tile_b; pad B up to a whole
    # number of tiles.  Weights stay resident across all batch tiles.
    tb = _round_up(min(tile_b, _round_up(B, _SUBLANE)), _SUBLANE)
    B_p = _round_up(B, tb)

    # Zero padding is semantics-preserving: padded inputs / hidden units / bias
    # entries are all zero, ReLU(0)=0, and padded output columns get sliced off.
    x_p = jnp.zeros((B_p, In_p), dt).at[:B, :In].set(x)
    w1_p = jnp.zeros((In_p, H_p), dt).at[:In, :H].set(w1)
    b1_p = jnp.zeros((1, H_p), dt).at[:, :H].set(b1)
    w2_p = jnp.zeros((H_p, O_p), dt).at[:H, :O].set(w2)
    b2_p = jnp.zeros((1, O_p), dt).at[:, :O].set(b2)

    grid = (B_p // tb,)

    out_p = pl.pallas_call(
        _qnet_kernel,
        out_shape=jax.ShapeDtypeStruct((B_p, O_p), dt),
        grid=grid,
        in_specs=[
            pl.BlockSpec((tb, In_p), lambda i: (i, 0)),     # x: tiled over batch
            pl.BlockSpec((In_p, H_p), lambda i: (0, 0)),    # W1: resident
            pl.BlockSpec((1, H_p), lambda i: (0, 0)),       # b1: resident
            pl.BlockSpec((H_p, O_p), lambda i: (0, 0)),     # W2: resident
            pl.BlockSpec((1, O_p), lambda i: (0, 0)),       # b2: resident
        ],
        out_specs=pl.BlockSpec((tb, O_p), lambda i: (i, 0)),
        compiler_params=pltpu.CompilerParams(
            # Batch tiles are independent -> parallel (lets v7x split across
            # its 2 TensorCores; harmless on single-TC v5e/v6e).
            dimension_semantics=("parallel",),
        ),
    )(x_p, w1_p, b1_p, w2_p, b2_p)

    return out_p[:B, :O]


def init_params(key, input_size, hidden_size, output_size, dtype=jnp.float32):
    """Deterministic init matching nn.Linear's U(-1/sqrt(fan_in), 1/sqrt(fan_in))."""
    k1, k2, k3, k4 = jax.random.split(key, 4)
    bound1 = 1.0 / (input_size ** 0.5)
    bound2 = 1.0 / (hidden_size ** 0.5)
    # stored pre-transposed: (in, out)
    w1 = jax.random.uniform(k1, (input_size, hidden_size), dtype,
                            minval=-bound1, maxval=bound1)
    b1 = jax.random.uniform(k2, (1, hidden_size), dtype,
                            minval=-bound1, maxval=bound1)
    w2 = jax.random.uniform(k3, (hidden_size, output_size), dtype,
                            minval=-bound2, maxval=bound2)
    b2 = jax.random.uniform(k4, (1, output_size), dtype,
                            minval=-bound2, maxval=bound2)
    return w1, b1, w2, b2


def _ref_forward(x, w1, b1, w2, b2):
    return jnp.maximum(x @ w1 + b1, 0.0) @ w2 + b2


if __name__ == "__main__":
    # Small shapes consistent with the DQN module (snake-AI style state).
    batch, input_size, hidden_size, output_size = 2, 16, 32, 4

    key = jax.random.PRNGKey(0)
    kx, kp, kb = jax.random.split(key, 3)
    x = jax.random.normal(kx, (batch, input_size), jnp.float32)
    w1, b1, w2, b2 = init_params(kp, input_size, hidden_size, output_size)

    # Tiny inference-style batch.
    out = linear_qnet_forward(x, w1, b1, w2, b2)
    out = jax.block_until_ready(out)
    ref = _ref_forward(x, w1, b1, w2, b2)
    assert out.shape == (batch, output_size)
    assert jnp.allclose(out, ref, atol=1e-5, rtol=1e-5)

    # Larger training-style batch exercises the batch-tiled grid (multiple
    # tiles, weights resident across them).
    xb = jax.random.normal(kb, (1024, input_size), jnp.float32)
    out_b = jax.block_until_ready(linear_qnet_forward(xb, w1, b1, w2, b2))
    ref_b = _ref_forward(xb, w1, b1, w2, b2)
    assert out_b.shape == (1024, output_size)
    assert jnp.allclose(out_b, ref_b, atol=1e-5, rtol=1e-5)

    print("KERNEL_OK")
</pallas_src>

<mosaic_0001>
module attributes {stable_mosaic.version = 11 : i64} {
  func.func @_qnet_kernel(%arg0: i32, %arg1: memref<8x128xf32, #tpu.memory_space<vmem>>, %arg2: memref<128x128xf32, #tpu.memory_space<vmem>>, %arg3: memref<1x128xf32, #tpu.memory_space<vmem>>, %arg4: memref<128x128xf32, #tpu.memory_space<vmem>>, %arg5: memref<1x128xf32, #tpu.memory_space<vmem>>, %arg6: memref<8x128xf32, #tpu.memory_space<vmem>>) attributes {dimension_semantics = [#tpu.dimension_semantics<parallel>], iteration_bounds = array<i64: 1>, scalar_prefetch = 0 : i64, scratch_operands = 0 : i64, tpu.core_type = #tpu.core_type<tc>, window_params = [{transform_indices = @transform_0, window_bounds = array<i64: 8, 128>}, {pipeline_mode = #tpu.pipeline_mode<synchronous>, transform_indices = @transform_1, window_bounds = array<i64: 128, 128>}, {pipeline_mode = #tpu.pipeline_mode<synchronous>, transform_indices = @transform_2, window_bounds = array<i64: 1, 128>}, {pipeline_mode = #tpu.pipeline_mode<synchronous>, transform_indices = @transform_3, window_bounds = array<i64: 128, 128>}, {pipeline_mode = #tpu.pipeline_mode<synchronous>, transform_indices = @transform_4, window_bounds = array<i64: 1, 128>}, {transform_indices = @transform_5, window_bounds = array<i64: 8, 128>}]} {
    %c0 = arith.constant 0 : index
    %c0_0 = arith.constant 0 : index
    %0 = vector.load %arg1[%c0, %c0_0] : memref<8x128xf32, #tpu.memory_space<vmem>>, vector<8x128xf32>
    %c0_1 = arith.constant 0 : index
    %c0_2 = arith.constant 0 : index
    %1 = vector.load %arg2[%c0_1, %c0_2] : memref<128x128xf32, #tpu.memory_space<vmem>>, vector<128x128xf32>
    %cst = arith.constant dense<0.000000e+00> : vector<8x128xf32>
    %2 = tpu.matmul %0, %1, %cst {dimension_numbers = #tpu.dot_dimension_numbers<[1], [0], [0], [1], [0, 0, 1, 1], [], []>} : vector<8x128xf32>, vector<128x128xf32>, vector<8x128xf32> -> vector<8x128xf32>
    %c0_3 = arith.constant 0 : index
    %c0_4 = arith.constant 0 : index
    %3 = vector.load %arg3[%c0_3, %c0_4] : memref<1x128xf32, #tpu.memory_space<vmem>>, vector<1x128xf32>
    %4 = vector.broadcast %3 : vector<1x128xf32> to vector<8x128xf32>
    %5 = arith.addf %2, %4 : vector<8x128xf32>
    %cst_5 = arith.constant 0.000000e+00 : f32
    %6 = vector.broadcast %cst_5 : f32 to vector<8x128xf32>
    %7 = arith.maximumf %5, %6 : vector<8x128xf32>
    %c0_6 = arith.constant 0 : index
    %c0_7 = arith.constant 0 : index
    %8 = vector.load %arg4[%c0_6, %c0_7] : memref<128x128xf32, #tpu.memory_space<vmem>>, vector<128x128xf32>
    %cst_8 = arith.constant dense<0.000000e+00> : vector<8x128xf32>
    %9 = tpu.matmul %7, %8, %cst_8 {dimension_numbers = #tpu.dot_dimension_numbers<[1], [0], [0], [1], [0, 0, 1, 1], [], []>} : vector<8x128xf32>, vector<128x128xf32>, vector<8x128xf32> -> vector<8x128xf32>
    %c0_9 = arith.constant 0 : index
    %c0_10 = arith.constant 0 : index
    %10 = vector.load %arg5[%c0_9, %c0_10] : memref<1x128xf32, #tpu.memory_space<vmem>>, vector<1x128xf32>
    %11 = vector.broadcast %10 : vector<1x128xf32> to vector<8x128xf32>
    %12 = arith.addf %9, %11 : vector<8x128xf32>
    %c0_11 = arith.constant 0 : index
    %c0_12 = arith.constant 0 : index
    %13 = vector.load %arg6[%c0_11, %c0_12] : memref<8x128xf32, #tpu.memory_space<vmem>>, vector<8x128xf32>
    tpu.vector_store %arg6[%c0_11, %c0_12], %12 {strides = array<i32>} : memref<8x128xf32, #tpu.memory_space<vmem>>, vector<8x128xf32>,
    return
  }
  func.func @transform_0(%arg0: i32) -> (i32, i32) {
    %c0_i32 = arith.constant 0 : i32
    %c0_i32_0 = arith.constant 0 : i32
    return %arg0, %c0_i32 : i32, i32
  }
  func.func @transform_1(%arg0: i32) -> (i32, i32) {
    %c0_i32 = arith.constant 0 : i32
    %c0_i32_0 = arith.constant 0 : i32
    %c0_i32_1 = arith.constant 0 : i32
    return %c0_i32, %c0_i32_0 : i32, i32
  }
  func.func @transform_2(%arg0: i32) -> (i32, i32) {
    %c0_i32 = arith.constant 0 : i32
    %c0_i32_0 = arith.constant 0 : i32
    %c0_i32_1 = arith.constant 0 : i32
    return %c0_i32, %c0_i32_0 : i32, i32
  }
  func.func @transform_3(%arg0: i32) -> (i32, i32) {
    %c0_i32 = arith.constant 0 : i32
    %c0_i32_0 = arith.constant 0 : i32
    %c0_i32_1 = arith.constant 0 : i32
    return %c0_i32, %c0_i32_0 : i32, i32
  }
  func.func @transform_4(%arg0: i32) -> (i32, i32) {
    %c0_i32 = arith.constant 0 : i32
    %c0_i32_0 = arith.constant 0 : i32
    %c0_i32_1 = arith.constant 0 : i32
    return %c0_i32, %c0_i32_0 : i32, i32
  }
  func.func @transform_5(%arg0: i32) -> (i32, i32) {
    %c0_i32 = arith.constant 0 : i32
    %c0_i32_0 = arith.constant 0 : i32
    return %arg0, %c0_i32 : i32, i32
  }
}

</mosaic_0001>

<llo_original>
// kernel: linear_qnet_forward.1
$region0: #{linear_qnet_forward.1}
  #allocation0 [shape = 'u32[]', space=smem, size = 0x4, offset = 0x4, fixed_abs, tag = 'smem constant byte address 0x4 - core index']
  #allocation1 [shape = 'u32[144,128]{1,0:T(1,128)}', space=vmem, size = 0x12000, scoped, tag = 'internal scratch']
  %s0 = inlined_call_operand.vmem [shape: f32[8,128], index: 0, kind: input, shape index: {}]
  %s1 = inlined_call_operand.vmem [shape: f32[128,128], index: 1, kind: input, shape index: {}]
  %s2 = inlined_call_operand.vmem [shape: f32[1,128], index: 2, kind: input, shape index: {}]
  %s3 = inlined_call_operand.vmem [shape: f32[128,128], index: 3, kind: input, shape index: {}]
  %s4 = inlined_call_operand.vmem [shape: f32[1,128], index: 4, kind: input, shape index: {}]
  %s5 = inlined_call_operand.vmem [shape: f32[8,128], index: 5, kind: output, shape index: {}]
  %s6 = sld [smem:[#allocation0]]
  $region30: #{linear_qnet_forward.1} parent=0
    _
  %s8 = ssub.s32 1, %s6
  %s9 = scalar_select 0, %s8, %s6
  // Predicated region
  $region2: #{linear_qnet_forward.1} parent=0 // pred_check
    _
  $region3: #{linear_qnet_forward.1} parent=0 // pred_check_branch
    %11 = sbr.rel (0) target = $region5
  $region4: #{linear_qnet_forward.1} parent=0 // pred_region
    _
  $region5: #{linear_qnet_forward.1} parent=0 // pred_fallthru
    _
  // Predicated region
  $region6: #{linear_qnet_forward.1} parent=0 // pred_check
    _
  $region7: #{linear_qnet_forward.1} parent=0 // pred_check_branch
    %13 = sbr.rel (0) target = $region9
  $region8: #{linear_qnet_forward.1} parent=0 // pred_region
    _
  $region9: #{linear_qnet_forward.1} parent=0 // pred_fallthru
    _
  // Predicated region
  $region10: #{linear_qnet_forward.1} parent=0 // pred_check
    _
  $region11: #{linear_qnet_forward.1} parent=0 // pred_check_branch
    %15 = sbr.rel (0) target = $region13
  $region12: #{linear_qnet_forward.1} parent=0 // pred_region
    _
  $region13: #{linear_qnet_forward.1} parent=0 // pred_fallthru
    _
  // Predicated region
  $region14: #{linear_qnet_forward.1} parent=0 // pred_check
    _
  $region15: #{linear_qnet_forward.1} parent=0 // pred_check_branch
    %17 = sbr.rel (0) target = $region17
  $region16: #{linear_qnet_forward.1} parent=0 // pred_region
    _
  $region17: #{linear_qnet_forward.1} parent=0 // pred_fallthru
    _
  // Predicated region
  $region18: #{linear_qnet_forward.1} parent=0 // pred_check
    _
  $region19: #{linear_qnet_forward.1} parent=0 // pred_check_branch
    %19 = sbr.rel (0) target = $region21
  $region20: #{linear_qnet_forward.1} parent=0 // pred_region
    _
  $region21: #{linear_qnet_forward.1} parent=0 // pred_fallthru
    _
  %v20 = vld [vmem:[%s0] sm:$0xff]
  %v21 = vld [vmem:[%s1] sm:$0xff]
  %v22 = vld [vmem:[%s1 + $0x8] sm:$0xff]
  %v23 = vld [vmem:[%s1 + $0x10] sm:$0xff]
  %v24 = vld [vmem:[%s1 + $0x18] sm:$0xff]
  %v25 = vld [vmem:[%s1 + $0x20] sm:$0xff]
  %v26 = vld [vmem:[%s1 + $0x28] sm:$0xff]
  %v27 = vld [vmem:[%s1 + $0x30] sm:$0xff]
  %v28 = vld [vmem:[%s1 + $0x38] sm:$0xff]
  %v29 = vld [vmem:[%s1 + $0x40] sm:$0xff]
  %v30 = vld [vmem:[%s1 + $0x48] sm:$0xff]
  %v31 = vld [vmem:[%s1 + $0x50] sm:$0xff]
  %v32 = vld [vmem:[%s1 + $0x58] sm:$0xff]
  %v33 = vld [vmem:[%s1 + $0x60] sm:$0xff]
  %v34 = vld [vmem:[%s1 + $0x68] sm:$0xff]
  %v35 = vld [vmem:[%s1 + $0x70] sm:$0xff]
  %v36 = vld [vmem:[%s1 + $0x78] sm:$0xff]
  %v37 = vld [vmem:[%s2] sm:$0x1]
  %v39 = vlaneseq
  %v40 = vshrl.u32 %v39, 7
  %v41 = vsub.s32 0, %v40
  %v42 = vrot.slane %v37, %v41
  %44 = vmatprep.subr.mxu0 0.0
  %45 = vmatpush1.msra.mxu0 %v21
  %46 = vmatprep.subr.mxu0 0.0
  %47 = vmatpush1.msra.mxu0 %v22
  %48 = vmatprep.subr.mxu0 0.0
  %49 = vmatpush1.msra.mxu0 %v23
  %50 = vmatprep.subr.mxu0 0.0
  %51 = vmatpush1.msra.mxu0 %v24
  %52 = vmatprep.subr.mxu0 0.0
  %53 = vmatpush1.msra.mxu0 %v25
  %54 = vmatprep.subr.mxu0 0.0
  %55 = vmatpush1.msra.mxu0 %v26
  %56 = vmatprep.subr.mxu0 0.0
  %57 = vmatpush1.msra.mxu0 %v27
  %58 = vmatprep.subr.mxu0 0.0
  %59 = vmatpush1.msra.mxu0 %v28
  %60 = vmatprep.subr.mxu0 0.0
  %61 = vmatpush1.msra.mxu0 %v29
  %62 = vmatprep.subr.mxu0 0.0
  %63 = vmatpush1.msra.mxu0 %v30
  %64 = vmatprep.subr.mxu0 0.0
  %65 = vmatpush1.msra.mxu0 %v31
  %66 = vmatprep.subr.mxu0 0.0
  %67 = vmatpush1.msra.mxu0 %v32
  %68 = vmatprep.subr.mxu0 0.0
  %69 = vmatpush1.msra.mxu0 %v33
  %70 = vmatprep.subr.mxu0 0.0
  %71 = vmatpush1.msra.mxu0 %v34
  %72 = vmatprep.subr.mxu0 0.0
  %73 = vmatpush1.msra.mxu0 %v35
  %74 = vmatprep.subr.mxu0 0.0
  %75 = vmatpush1.msra.mxu0 %v36
  %76 = vmatprep.subr.mxu0 0.0
  %77 = vmatpush1.msra.mxu0 0.0
  %78 = vmatprep.subr.mxu0 0.0
  %79 = vmatpush1.msra.mxu0 0.0
  %80 = vmatprep.subr.mxu0 0.0
  %81 = vmatpush1.msra.mxu0 0.0
  %82 = vmatprep.subr.mxu0 0.0
  %83 = vmatpush1.msra.mxu0 0.0
  %84 = vmatprep.subr.mxu0 0.0
  %85 = vmatpush1.msra.mxu0 0.0
  %86 = vmatprep.subr.mxu0 0.0
  %87 = vmatpush1.msra.mxu0 0.0
  %88 = vmatprep.subr.mxu0 0.0
  %89 = vmatpush1.msra.mxu0 0.0
  %90 = vmatprep.subr.mxu0 0.0
  %91 = vmatpush1.msra.mxu0 0.0
  %92 = vmatprep.subr.mxu0 0.0
  %93 = vmatpush1.msra.mxu0 0.0
  %94 = vmatprep.subr.mxu0 0.0
  %95 = vmatpush1.msra.mxu0 0.0
  %96 = vmatprep.subr.mxu0 0.0
  %97 = vmatpush1.msra.mxu0 0.0
  %98 = vmatprep.subr.mxu0 0.0
  %99 = vmatpush1.msra.mxu0 0.0
  %100 = vmatprep.subr.mxu0 0.0
  %101 = vmatpush1.msra.mxu0 0.0
  %102 = vmatprep.subr.mxu0 0.0
  %103 = vmatpush1.msra.mxu0 0.0
  %104 = vmatprep.subr.mxu0 0.0
  %105 = vmatpush1.msra.mxu0 0.0
  %106 = vmatprep.subr.mxu0 0.0
  %107 = vmatpush1.msra.mxu0 0.0
  %108 = vmatprep.mubr.f32.mxu0 0.0
  %109 = vmatmul.mubr.f32.gmra.mrb[0].mxu0 %v20
  %v110 = vpop.f32.mrb[0].mxu0
  %v111 = vadd.f32 %v42, %v110
  %v112 = vpop.f32.mrb[0].mxu0
  %113 = vdwg.mxu0
  %v114 = vmax.f32 %v111, 0.0
  %v115 = vld [vmem:[%s3] sm:$0xff]
  %v116 = vld [vmem:[%s3 + $0x8] sm:$0xff]
  %v117 = vld [vmem:[%s3 + $0x10] sm:$0xff]
  %v118 = vld [vmem:[%s3 + $0x18] sm:$0xff]
  %v119 = vld [vmem:[%s3 + $0x20] sm:$0xff]
  %v120 = vld [vmem:[%s3 + $0x28] sm:$0xff]
  %v121 = vld [vmem:[%s3 + $0x30] sm:$0xff]
  %v122 = vld [vmem:[%s3 + $0x38] sm:$0xff]
  %v123 = vld [vmem:[%s3 + $0x40] sm:$0xff]
  %v124 = vld [vmem:[%s3 + $0x48] sm:$0xff]
  %v125 = vld [vmem:[%s3 + $0x50] sm:$0xff]
  %v126 = vld [vmem:[%s3 + $0x58] sm:$0xff]
  %v127 = vld [vmem:[%s3 + $0x60] sm:$0xff]
  %v128 = vld [vmem:[%s3 + $0x68] sm:$0xff]
  %v129 = vld [vmem:[%s3 + $0x70] sm:$0xff]
  %v130 = vld [vmem:[%s3 + $0x78] sm:$0xff]
  %v131 = vld [vmem:[%s4] sm:$0x1]
  %v133 = vlaneseq
  %v134 = vshrl.u32 %v133, 7
  %v135 = vsub.s32 0, %v134
  %v136 = vrot.slane %v131, %v135
  %138 = vmatprep.subr.mxu0 0.0
  %139 = vmatpush1.msra.mxu0 %v115
  %140 = vmatprep.subr.mxu0 0.0
  %141 = vmatpush1.msra.mxu0 %v116
  %142 = vmatprep.subr.mxu0 0.0
  %143 = vmatpush1.msra.mxu0 %v117
  %144 = vmatprep.subr.mxu0 0.0
  %145 = vmatpush1.msra.mxu0 %v118
  %146 = vmatprep.subr.mxu0 0.0
  %147 = vmatpush1.msra.mxu0 %v119
  %148 = vmatprep.subr.mxu0 0.0
  %149 = vmatpush1.msra.mxu0 %v120
  %150 = vmatprep.subr.mxu0 0.0
  %151 = vmatpush1.msra.mxu0 %v121
  %152 = vmatprep.subr.mxu0 0.0
  %153 = vmatpush1.msra.mxu0 %v122
  %154 = vmatprep.subr.mxu0 0.0
  %155 = vmatpush1.msra.mxu0 %v123
  %156 = vmatprep.subr.mxu0 0.0
  %157 = vmatpush1.msra.mxu0 %v124
  %158 = vmatprep.subr.mxu0 0.0
  %159 = vmatpush1.msra.mxu0 %v125
  %160 = vmatprep.subr.mxu0 0.0
  %161 = vmatpush1.msra.mxu0 %v126
  %162 = vmatprep.subr.mxu0 0.0
  %163 = vmatpush1.msra.mxu0 %v127
  %164 = vmatprep.subr.mxu0 0.0
  %165 = vmatpush1.msra.mxu0 %v128
  %166 = vmatprep.subr.mxu0 0.0
  %167 = vmatpush1.msra.mxu0 %v129
  %168 = vmatprep.subr.mxu0 0.0
  %169 = vmatpush1.msra.mxu0 %v130
  %170 = vmatprep.subr.mxu0 0.0
  %171 = vmatpush1.msra.mxu0 0.0
  %172 = vmatprep.subr.mxu0 0.0
  %173 = vmatpush1.msra.mxu0 0.0
  %174 = vmatprep.subr.mxu0 0.0
  %175 = vmatpush1.msra.mxu0 0.0
  %176 = vmatprep.subr.mxu0 0.0
  %177 = vmatpush1.msra.mxu0 0.0
  %178 = vmatprep.subr.mxu0 0.0
  %179 = vmatpush1.msra.mxu0 0.0
  %180 = vmatprep.subr.mxu0 0.0
  %181 = vmatpush1.msra.mxu0 0.0
  %182 = vmatprep.subr.mxu0 0.0
  %183 = vmatpush1.msra.mxu0 0.0
  %184 = vmatprep.subr.mxu0 0.0
  %185 = vmatpush1.msra.mxu0 0.0
  %186 = vmatprep.subr.mxu0 0.0
  %187 = vmatpush1.msra.mxu0 0.0
  %188 = vmatprep.subr.mxu0 0.0
  %189 = vmatpush1.msra.mxu0 0.0
  %190 = vmatprep.subr.mxu0 0.0
  %191 = vmatpush1.msra.mxu0 0.0
  %192 = vmatprep.subr.mxu0 0.0
  %193 = vmatpush1.msra.mxu0 0.0
  %194 = vmatprep.subr.mxu0 0.0
  %195 = vmatpush1.msra.mxu0 0.0
  %196 = vmatprep.subr.mxu0 0.0
  %197 = vmatpush1.msra.mxu0 0.0
  %198 = vmatprep.subr.mxu0 0.0
  %199 = vmatpush1.msra.mxu0 0.0
  %200 = vmatprep.subr.mxu0 0.0
  %201 = vmatpush1.msra.mxu0 0.0
  %202 = vmatprep.mubr.f32.mxu0 0.0
  %203 = vmatmul.mubr.f32.gmra.mrb[0].mxu0 %v114
  %v204 = vpop.f32.mrb[0].mxu0
  %v205 = vadd.f32 %v136, %v204
  %v206 = vpop.f32.mrb[0].mxu0
  %207 = vdwg.mxu0
  %208 = vst [vmem:[%s5] sm:$0xff] %v205
  // Predicated region
  $region22: #{linear_qnet_forward.1} parent=0 // pred_check
    _
  $region23: #{linear_qnet_forward.1} parent=0 // pred_check_branch
    %210 = sbr.rel (0) target = $region25
  $region24: #{linear_qnet_forward.1} parent=0 // pred_region
    _
  $region25: #{linear_qnet_forward.1} parent=0 // pred_fallthru
    _
  // Predicated region
  $region26: #{linear_qnet_forward.1} parent=0 // pred_check
    _
  $region27: #{linear_qnet_forward.1} parent=0 // pred_check_branch
    %212 = sbr.rel (0) target = $region29
  $region28: #{linear_qnet_forward.1} parent=0 // pred_region
    _
  $region29: #{linear_qnet_forward.1} parent=0 // pred_fallthru
    _

</llo_original>
